<compile_context>
chip_gen: v5e
topology: v5e:2x2
jax: 0.10.0
libtpu: 0.0.40
codegen_flags: <defaults>
</compile_context>

<pallas_src>
import functools
from itertools import accumulate

import jax
import jax.numpy as jnp
from jax.experimental import pallas as pl
from jax.experimental.pallas import tpu as pltpu


def _round_up(n, m):
    return (n + m - 1) // m * m


def _vmem_budget_bytes():
    """Generation-aware VMEM budget: capacity minus headroom."""
    try:
        cap = int(pltpu.get_tpu_info().vmem_capacity_bytes)
    except Exception:
        cap = 64 * 2 ** 20          # v7x per-TC VMEM; safe everywhere
    return max(min(int(cap * 0.85), cap - 8 * 2 ** 20), 16 * 2 ** 20)


def _field_linear_resident_kernel(idx_ref, w_ref, b_ref, o_ref, *,
                                  compute_dtype):
    # idx_ref: (TB, F) int32   precomputed x + offset for this batch tile
    # w_ref:   (Vp, Dp) compute_dtype   whole padded table (resident)
    # b_ref:   (1, Dp) f32
    # o_ref:   (TB, Dp) f32
    idx = idx_ref[...]
    TB, F = idx.shape
    Vp = w_ref.shape[0]

    iota_v = jax.lax.broadcasted_iota(jnp.int32, (TB, Vp), 1)
    # Counts are exact small integers (<= F), exact in bf16 for F <= 256.
    counts = jnp.zeros((TB, Vp), compute_dtype)
    for f in range(F):                              # small static field loop
        counts = counts + (idx[:, f:f + 1] == iota_v).astype(compute_dtype)

    o_ref[...] = (jnp.dot(counts, w_ref[...],
                          preferred_element_type=jnp.float32)
                  + b_ref[...]).astype(o_ref.dtype)


def _field_linear_tiled_kernel(idx_ref, w_ref, b_ref, o_ref, acc_ref, *,
                               compute_dtype):
    # idx_ref: (TB, F) int32   precomputed x + offset for this batch tile
    # w_ref:   (TV, Dp) compute_dtype   weight rows [k*TV, (k+1)*TV)
    # b_ref:   (1, Dp) f32
    # o_ref:   (TB, Dp) f32
    # acc_ref: (TB, Dp) f32    VMEM accumulator, resident across the V axis
    k = pl.program_id(1)

    @pl.when(k == 0)
    def _init():
        # Seed with the bias: saves a (TB, Dp) add on the last step.
        acc_ref[...] = jnp.broadcast_to(b_ref[...], acc_ref.shape)

    idx = idx_ref[...]
    TB, F = idx.shape
    TV = w_ref.shape[0]

    # Row ids relative to this V tile; ids outside [0, TV) never match iota.
    local = idx - k * TV
    iota_v = jax.lax.broadcasted_iota(jnp.int32, (TB, TV), 1)
    counts = jnp.zeros((TB, TV), compute_dtype)
    for f in range(F):
        counts = counts + (local[:, f:f + 1] == iota_v).astype(compute_dtype)

    acc_ref[...] += jnp.dot(counts, w_ref[...],
                            preferred_element_type=jnp.float32)

    @pl.when(k == pl.num_programs(1) - 1)
    def _finalize():
        o_ref[...] = acc_ref[...].astype(o_ref.dtype)


def field_linear(x, offset, weight, bias, *, block_b=512, block_v=1024,
                 compute_dtype=jnp.bfloat16,
                 max_resident_weight_bytes=16 * 2 ** 20,
                 weight_buffer_count=2):
    """x: (B, F) int, offset: (F,) int, weight: (V, D) f32, bias: (D,) f32.

    compute_dtype=bfloat16 (default) halves weight HBM/VMEM traffic and uses
    the native bf16 MXU; counts stay exact, error is bounded by the weight
    cast.  Pass jnp.float32 for bit-exact results.
    """
    x = x.astype(jnp.int32)                    # PyTorch passes int64; cast
    offset = offset.astype(jnp.int32)
    weight = weight.astype(jnp.float32)
    bias = bias.astype(jnp.float32)

    B, F = x.shape
    V, D = weight.shape
    w_bytes = jnp.dtype(compute_dtype).itemsize

    # Lane-dense output: pad out_features to a multiple of 128.
    # TODO(synk): for D > 128 on v6e/v7x, rounding Dp to a multiple of 256 may
    # fill the 256-wide MXU better; verify in a bundle dump before enabling.
    Dp = _round_up(max(D, 128), 128)

    # Batch tile (sublane axis) - the primary knob for weight re-streaming.
    TB = min(_round_up(B, 8), _round_up(block_b, 8))
    # Ensure >= 2 batch tiles when there is enough work, so the leading
    # "parallel" axis shards across v7x's two TensorCores (harmless on 1-TC
    # v5e/v6e).
    if B > 8 and _round_up(B, TB) // TB < 2:
        TB = _round_up((B + 1) // 2, 8)

    vmem_budget = _vmem_budget_bytes()
    Vp_full = _round_up(max(V, 8), 8)
    w_table_bytes = Vp_full * Dp * w_bytes

    def resident_need(tb):
        return (2 * tb * F * 4                      # idx tiles (double-buffered)
                + 2 * w_table_bytes                 # resident weight (2 bufs)
                + 2 * tb * Dp * 4                   # output tiles
                + tb * Vp_full * (w_bytes + 4)      # counts + iota temporaries
                + 2 * Dp * 4)                       # bias

    use_resident = w_table_bytes <= max_resident_weight_bytes
    if use_resident and resident_need(TB) > vmem_budget:
        tb = TB
        while resident_need(tb) > vmem_budget and tb > 8:
            tb = _round_up(max(tb // 2, 8), 8)
        if resident_need(tb) <= vmem_budget:
            TB = tb
        else:
            use_resident = False

    # Precompute global row ids once in XLA (drops off_ref and a per-step add).
    xg = x + offset[None, :]

    if use_resident:
        # ---------- Resident-weight path: 1-D batch grid, no V reduction ----
        Vp = Vp_full
        Bp = _round_up(B, TB)
        x_p = xg if Bp == B else jnp.zeros((Bp, F), jnp.int32).at[:B].set(xg)
        if (Vp, Dp) != (V, D):
            w_p = jnp.zeros((Vp, Dp), compute_dtype).at[:V, :D].set(
                weight.astype(compute_dtype))
        else:
            w_p = weight.astype(compute_dtype)
        b_p = jnp.zeros((1, Dp), jnp.float32).at[0, :D].set(bias)

        vmem_limit = int(min(vmem_budget,
                             max(2 * resident_need(TB), 16 * 2 ** 20)))
        kernel = functools.partial(_field_linear_resident_kernel,
                                   compute_dtype=compute_dtype)
        out_p = pl.pallas_call(
            kernel,
            out_shape=jax.ShapeDtypeStruct((Bp, Dp), jnp.float32),
            grid_spec=pltpu.PrefetchScalarGridSpec(
                num_scalar_prefetch=0,
                grid=(Bp // TB,),
                in_specs=[
                    pl.BlockSpec((TB, F), lambda i: (i, 0)),
                    # Constant block index -> the whole table is DMA'd once
                    # and stays resident across batch tiles.
                    pl.BlockSpec((Vp, Dp), lambda i: (0, 0)),
                    pl.BlockSpec((1, Dp), lambda i: (0, 0)),
                ],
                out_specs=pl.BlockSpec((TB, Dp), lambda i: (i, 0)),
            ),
            compiler_params=pltpu.CompilerParams(
                dimension_semantics=("parallel",),
                vmem_limit_bytes=vmem_limit,
            ),
        )(x_p, w_p, b_p)
        return out_p[:B, :D]

    # ---------- Tiled path: (batch tiles) x (V tiles) reduction -------------
    TV = min(_round_up(V, 8), _round_up(block_v, 8))

    def tiled_need(tb, tv):
        return (2 * tb * F * 4                          # idx tiles
                + max(weight_buffer_count, 2) * tv * Dp * w_bytes  # weight
                + 2 * tb * Dp * 4                       # output tiles
                + tb * Dp * 4                           # f32 accumulator
                + tb * tv * (w_bytes + 4)               # counts + iota temps
                + 2 * Dp * 4)                           # bias

    while tiled_need(TB, TV) > vmem_budget and TV > 8:
        TV = _round_up(max(TV // 2, 8), 8)
    while tiled_need(TB, TV) > vmem_budget and TB > 8:
        TB = _round_up(max(TB // 2, 8), 8)

    Bp = _round_up(B, TB)
    Vp = _round_up(V, TV)
    x_p = xg if Bp == B else jnp.zeros((Bp, F), jnp.int32).at[:B].set(xg)
    if (Vp, Dp) != (V, D):
        w_p = jnp.zeros((Vp, Dp), compute_dtype).at[:V, :D].set(
            weight.astype(compute_dtype))
    else:
        w_p = weight.astype(compute_dtype)
    b_p = jnp.zeros((1, Dp), jnp.float32).at[0, :D].set(bias)

    vmem_limit = int(min(vmem_budget,
                         max(2 * tiled_need(TB, TV), 16 * 2 ** 20)))

    # Optional deeper weight-tile buffering (profile-driven; helps on v5e).
    w_spec_kwargs = {}
    if weight_buffer_count and weight_buffer_count > 2:
        w_spec_kwargs["pipeline_mode"] = pl.Buffered(weight_buffer_count)
    w_spec = pl.BlockSpec((TV, Dp), lambda i, k: (k, 0), **w_spec_kwargs)

    kernel = functools.partial(_field_linear_tiled_kernel,
                               compute_dtype=compute_dtype)
    out_p = pl.pallas_call(
        kernel,
        out_shape=jax.ShapeDtypeStruct((Bp, Dp), jnp.float32),
        grid_spec=pltpu.PrefetchScalarGridSpec(
            num_scalar_prefetch=0,
            grid=(Bp // TB, Vp // TV),
            in_specs=[
                pl.BlockSpec((TB, F), lambda i, k: (i, 0)),
                w_spec,
                pl.BlockSpec((1, Dp), lambda i, k: (0, 0)),
            ],
            out_specs=pl.BlockSpec((TB, Dp), lambda i, k: (i, 0)),
            scratch_shapes=[pltpu.VMEM((TB, Dp), jnp.float32)],
        ),
        compiler_params=pltpu.CompilerParams(
            dimension_semantics=("parallel", "arbitrary"),
            vmem_limit_bytes=vmem_limit,
        ),
    )(x_p, w_p, b_p)
    return out_p[:B, :D]


if __name__ == "__main__":
    key = jax.random.PRNGKey(0)

    # Module config (small, consistent with the forward):
    field_dims = [3, 5, 4, 8]          # sum = 20 embedding rows
    out_features = 16
    num_fields = len(field_dims)
    vocab = sum(field_dims)

    k_w, k_x1, k_x2 = jax.random.split(key, 3)

    # Deterministic parameter init (nn.Embedding default ~ N(0,1); bias zeros).
    weight = jax.random.normal(k_w, (vocab, out_features), dtype=jnp.float32)
    bias = jnp.zeros((out_features,), dtype=jnp.float32)

    # offset buffer: [0, *accumulate(field_dims)][:-1]
    offset = jnp.asarray([0] + list(accumulate(field_dims))[:-1],
                         dtype=jnp.int32)

    def make_x(k, batch):
        u = jax.random.uniform(k, (batch, num_fields))
        return (u * jnp.asarray(field_dims, dtype=jnp.float32)).astype(
            jnp.int32)

    def reference(x):
        return jnp.sum(weight[x + offset[None, :]], axis=1) + bias

    # --- Check 1: resident-weight path, float32 compute (bit-exact). ---
    x1 = make_x(k_x1, 8)
    out1 = jax.block_until_ready(
        field_linear(x1, offset, weight, bias, compute_dtype=jnp.float32))
    ref1 = reference(x1)
    assert out1.shape == (8, out_features)
    assert jnp.allclose(out1, ref1, atol=1e-5, rtol=1e-5), (out1, ref1)

    # --- Check 2: resident path, default bf16 weight streaming; batch is
    #     split into >= 2 tiles (v7x megacore) with row padding. ---
    x2 = make_x(k_x2, 24)
    out2 = jax.block_until_ready(field_linear(x2, offset, weight, bias))
    ref2 = reference(x2)
    assert out2.shape == (24, out_features)
    # bf16 weight cast: rel err <= ~2^-8 per row, summed over 4 fields.
    assert jnp.allclose(out2, ref2, atol=5e-2, rtol=5e-2), (out2, ref2)

    # --- Check 3: tiled-reduction path (forced), multi-tile batch and V,
    #     float32 for bit-exactness of the accumulation path. ---
    out3 = jax.block_until_ready(
        field_linear(x2, offset, weight, bias, block_b=8, block_v=8,
                     compute_dtype=jnp.float32, max_resident_weight_bytes=0))
    assert out3.shape == (24, out_features)
    assert jnp.allclose(out3, ref2, atol=1e-5, rtol=1e-5), (out3, ref2)

    print("KERNEL_OK")
</pallas_src>

<mosaic_0001>
module attributes {stable_mosaic.version = 11 : i64} {
  func.func @_field_linear_resident_kernel(%arg0: i32, %arg1: memref<8x4xi32, #tpu.memory_space<vmem>>, %arg2: memref<24x128xf32, #tpu.memory_space<vmem>>, %arg3: memref<1x128xf32, #tpu.memory_space<vmem>>, %arg4: memref<8x128xf32, #tpu.memory_space<vmem>>) attributes {dimension_semantics = [#tpu.dimension_semantics<parallel>], iteration_bounds = array<i64: 1>, scalar_prefetch = 0 : i64, scratch_operands = 0 : i64, tpu.core_type = #tpu.core_type<tc>, window_params = [{transform_indices = @transform_0, window_bounds = array<i64: 8, 4>}, {pipeline_mode = #tpu.pipeline_mode<synchronous>, transform_indices = @transform_1, window_bounds = array<i64: 24, 128>}, {pipeline_mode = #tpu.pipeline_mode<synchronous>, transform_indices = @transform_2, window_bounds = array<i64: 1, 128>}, {transform_indices = @transform_3, window_bounds = array<i64: 8, 128>}]} {
    %c0 = arith.constant 0 : index
    %c0_0 = arith.constant 0 : index
    %0 = vector.load %arg1[%c0, %c0_0] : memref<8x4xi32, #tpu.memory_space<vmem>>, vector<8x4xi32>
    %1 = tpu.iota {dimensions = array<i32: 1>} : vector<8x24xi32>
    %cst = arith.constant 0.000000e+00 : f32
    %2 = vector.broadcast %cst : f32 to vector<8x24xf32>
    %3 = vector.extract_strided_slice %0 {offsets = [0, 0], sizes = [8, 1], strides = [1, 1]} : vector<8x4xi32> to vector<8x1xi32>
    %4 = vector.broadcast %3 : vector<8x1xi32> to vector<8x24xi32>
    %5 = arith.cmpi eq, %4, %1 : vector<8x24xi32>
    %6 = arith.extui %5 : vector<8x24xi1> to vector<8x24xi32>
    %7 = arith.sitofp %6 : vector<8x24xi32> to vector<8x24xf32>
    %8 = arith.addf %2, %7 : vector<8x24xf32>
    %9 = vector.extract_strided_slice %0 {offsets = [0, 1], sizes = [8, 1], strides = [1, 1]} : vector<8x4xi32> to vector<8x1xi32>
    %10 = vector.broadcast %9 : vector<8x1xi32> to vector<8x24xi32>
    %11 = arith.cmpi eq, %10, %1 : vector<8x24xi32>
    %12 = arith.extui %11 : vector<8x24xi1> to vector<8x24xi32>
    %13 = arith.sitofp %12 : vector<8x24xi32> to vector<8x24xf32>
    %14 = arith.addf %8, %13 : vector<8x24xf32>
    %15 = vector.extract_strided_slice %0 {offsets = [0, 2], sizes = [8, 1], strides = [1, 1]} : vector<8x4xi32> to vector<8x1xi32>
    %16 = vector.broadcast %15 : vector<8x1xi32> to vector<8x24xi32>
    %17 = arith.cmpi eq, %16, %1 : vector<8x24xi32>
    %18 = arith.extui %17 : vector<8x24xi1> to vector<8x24xi32>
    %19 = arith.sitofp %18 : vector<8x24xi32> to vector<8x24xf32>
    %20 = arith.addf %14, %19 : vector<8x24xf32>
    %21 = vector.extract_strided_slice %0 {offsets = [0, 3], sizes = [8, 1], strides = [1, 1]} : vector<8x4xi32> to vector<8x1xi32>
    %22 = vector.broadcast %21 : vector<8x1xi32> to vector<8x24xi32>
    %23 = arith.cmpi eq, %22, %1 : vector<8x24xi32>
    %24 = arith.extui %23 : vector<8x24xi1> to vector<8x24xi32>
    %25 = arith.sitofp %24 : vector<8x24xi32> to vector<8x24xf32>
    %26 = arith.addf %20, %25 : vector<8x24xf32>
    %c0_1 = arith.constant 0 : index
    %c0_2 = arith.constant 0 : index
    %27 = vector.load %arg2[%c0_1, %c0_2] : memref<24x128xf32, #tpu.memory_space<vmem>>, vector<24x128xf32>
    %cst_3 = arith.constant dense<0.000000e+00> : vector<8x128xf32>
    %28 = tpu.matmul %26, %27, %cst_3 {dimension_numbers = #tpu.dot_dimension_numbers<[1], [0], [0], [1], [0, 0, 1, 1], [], []>} : vector<8x24xf32>, vector<24x128xf32>, vector<8x128xf32> -> vector<8x128xf32>
    %c0_4 = arith.constant 0 : index
    %c0_5 = arith.constant 0 : index
    %29 = vector.load %arg3[%c0_4, %c0_5] : memref<1x128xf32, #tpu.memory_space<vmem>>, vector<1x128xf32>
    %30 = vector.broadcast %29 : vector<1x128xf32> to vector<8x128xf32>
    %31 = arith.addf %28, %30 : vector<8x128xf32>
    %c0_6 = arith.constant 0 : index
    %c0_7 = arith.constant 0 : index
    %32 = vector.load %arg4[%c0_6, %c0_7] : memref<8x128xf32, #tpu.memory_space<vmem>>, vector<8x128xf32>
    tpu.vector_store %arg4[%c0_6, %c0_7], %31 {strides = array<i32>} : memref<8x128xf32, #tpu.memory_space<vmem>>, vector<8x128xf32>,
    return
  }
  func.func @transform_0(%arg0: i32) -> (i32, i32) {
    %c0_i32 = arith.constant 0 : i32
    %c0_i32_0 = arith.constant 0 : i32
    return %arg0, %c0_i32 : i32, i32
  }
  func.func @transform_1(%arg0: i32) -> (i32, i32) {
    %c0_i32 = arith.constant 0 : i32
    %c0_i32_0 = arith.constant 0 : i32
    %c0_i32_1 = arith.constant 0 : i32
    return %c0_i32, %c0_i32_0 : i32, i32
  }
  func.func @transform_2(%arg0: i32) -> (i32, i32) {
    %c0_i32 = arith.constant 0 : i32
    %c0_i32_0 = arith.constant 0 : i32
    %c0_i32_1 = arith.constant 0 : i32
    return %c0_i32, %c0_i32_0 : i32, i32
  }
  func.func @transform_3(%arg0: i32) -> (i32, i32) {
    %c0_i32 = arith.constant 0 : i32
    %c0_i32_0 = arith.constant 0 : i32
    return %arg0, %c0_i32 : i32, i32
  }
}

</mosaic_0001>

<llo_original>
// kernel: tpu_custom_call.1
$region0: #{tpu_custom_call.1}
  #allocation0 [shape = 'u32[]', space=smem, size = 0x4, offset = 0x4, fixed_abs, tag = 'smem constant byte address 0x4 - core index']
  #allocation1 [shape = 'u32[72,128]{1,0:T(1,128)}', space=vmem, size = 0x9000, scoped, tag = 'internal scratch']
  %s0 = inlined_call_operand.vmem [shape: s32[8,4], index: 0, kind: input, shape index: {}]
  %s1 = inlined_call_operand.hbm [shape: f32[24,128], index: 1, kind: input, shape index: {}]
  %s2 = inlined_call_operand.vmem [shape: f32[1,128], index: 2, kind: input, shape index: {}]
  %s3 = inlined_call_operand.hbm [shape: f32[8,128], index: 3, kind: output, shape index: {}]
  %s4 = sld [smem:[#allocation0]]
  $region26: #{tpu_custom_call.1} parent=0
    _
  %s6 = ssub.s32 1, %s4
  %s7 = scalar_select 0, %s6, %s4
  $region1: #{tpu_custom_call.1} parent=0
    #allocation2 [shape = 'u8[12288]{0}', space=vmem, size = 0x3000, scoped, tag = 'input window, operand 1, single buffered']
    #allocation3 [shape = 's32[1]{0}', space=sflag, size = 0x4, scoped, tag = 'scoped memory for tpu_custom_call.1']
    #allocation4 [shape = 's32[1]{0}', space=sflag, size = 0x4, scoped, tag = 'scoped memory for tpu_custom_call.1']
    #allocation5 [shape = 'u8[4096]{0}', space=vmem, size = 0x1000, scoped, tag = 'output window, operand 0, single buffered']
    %8 = vsyncpa [#allocation3], 0
    %9 = vsyncpa [#allocation4], 0
    // Predicated region
    $region2: #{tpu_custom_call.1} parent=1 // pred_check
      _
    $region3: #{tpu_custom_call.1} parent=1 // pred_check_branch
      %11 = sbr.rel (0) target = $region5
    $region4: #{tpu_custom_call.1} parent=1 // pred_region
      _
    $region5: #{tpu_custom_call.1} parent=1 // pred_fallthru
      _
    // Predicated region
    $region6: #{tpu_custom_call.1} parent=1 // pred_check
      _
    $region7: #{tpu_custom_call.1} parent=1 // pred_check_branch
      %13 = sbr.rel (0) target = $region9
    $region8: #{tpu_custom_call.1} parent=1 // pred_region
      %15 = vsyncadd [#allocation3], 0
      %s16 = sshll.u32 %s1, 4
      %s17 = int_to_ptr.hbm [resolvable:$true] %s16
      %s18 = sshll.u32 [#allocation2], 4
      %s19 = int_to_ptr.vmem [resolvable:$true] %s18
      %24 = dma.hbm_to_vmem [thread:$0]  %s17, 384, %s19, [#allocation3], 128, 128, 8
    $region9: #{tpu_custom_call.1} parent=1 // pred_fallthru
      _
    // Predicated region
    $region10: #{tpu_custom_call.1} parent=1 // pred_check
      _
    $region11: #{tpu_custom_call.1} parent=1 // pred_check_branch
      %26 = sbr.rel (0) target = $region13
    $region12: #{tpu_custom_call.1} parent=1 // pred_region
      _
    $region13: #{tpu_custom_call.1} parent=1 // pred_fallthru
      _
    // Predicated region
    $region14: #{tpu_custom_call.1} parent=1 // pred_check
      _
    $region15: #{tpu_custom_call.1} parent=1 // pred_check_branch
      %28 = sbr.rel (0) target = $region17
    $region16: #{tpu_custom_call.1} parent=1 // pred_region
      %30 = dma.done [#allocation3], 384
    $region17: #{tpu_custom_call.1} parent=1 // pred_fallthru
      _
    %v31 = vld [vmem:[%s0] sm:$0xff]
    %v32 = vlaneseq
    %v33 = vand.u32 %v32, 127
    %34 = vset.pattern.permute.xlu0 0
    %35 = vperm.xlu0 %34, %v31
    %v36 = vpop.permute.xlu0 %35
    %vm37 = vcmp.eq.s32.totalorder %v36, %v33
    %v38 = vsel %vm37, 1, 0
    %v39 = vcvt.s32.f32 %v38
    %v40 = vadd.f32 %v39, 0.0
    %41 = vset.pattern.permute.xlu0 1
    %42 = vperm.xlu0 %41, %v31
    %v43 = vpop.permute.xlu0 %42
    %vm44 = vcmp.eq.s32.totalorder %v43, %v33
    %v45 = vsel %vm44, 1, 0
    %v46 = vcvt.s32.f32 %v45
    %v47 = vadd.f32 %v40, %v46
    %48 = vset.pattern.permute.xlu0 2
    %49 = vperm.xlu0 %48, %v31
    %v50 = vpop.permute.xlu0 %49
    %vm51 = vcmp.eq.s32.totalorder %v50, %v33
    %v52 = vsel %vm51, 1, 0
    %v53 = vcvt.s32.f32 %v52
    %v54 = vadd.f32 %v47, %v53
    %55 = vset.pattern.permute.xlu0 3
    %56 = vperm.xlu0 %55, %v31
    %v57 = vpop.permute.xlu0 %56
    %vm58 = vcmp.eq.s32.totalorder %v57, %v33
    %v59 = vsel %vm58, 1, 0
    %v60 = vcvt.s32.f32 %v59
    %v61 = vadd.f32 %v54, %v60
    %v62 = vld [vmem:[#allocation2] sm:$0xff]
    %v63 = vld [vmem:[#allocation2 + $0x8] sm:$0xff]
    %v64 = vld [vmem:[#allocation2 + $0x10] sm:$0xff]
    %v65 = vld [vmem:[%s2] sm:$0x1]
    %v67 = vperm.slane %v65, 0
    %vm69 = vcmask 195584
    %v71 = vsel %vm69, %v61, 0
    %73 = vmatpush.msra.mxu0 0.0
    %74 = vmatpush.msra.mxu0 0.0
    %75 = vmatpush.msra.mxu0 0.0
    %76 = vmatpush.msra.mxu0 0.0
    %77 = vmatpush.msra.mxu0 0.0
    %78 = vmatpush.msra.mxu0 0.0
    %79 = vmatpush.msra.mxu0 0.0
    %80 = vmatpush.msra.mxu0 0.0
    %81 = vmatpush.msra.mxu0 0.0
    %82 = vmatpush.msra.mxu0 0.0
    %83 = vmatpush.msra.mxu0 0.0
    %84 = vmatpush.msra.mxu0 0.0
    %85 = vmatpush.msra.mxu0 0.0
    %86 = vmatpush.msra.mxu0 %v64
    %87 = vmatpush.msra.mxu0 %v63
    %88 = vmatpush.msra.mxu0 %v62
    %89 = vmatmul.f32.gmra.mxu0 %v71
    %v90 = vpop.f32.mrf.mxu0
    %v91 = vadd.f32 %v67, %v90
    %92 = vdwg.mxu0
    %93 = vst [vmem:[#allocation5] sm:$0xff] %v91
    // Predicated region
    $region18: #{tpu_custom_call.1} parent=1 // pred_check
      _
    $region19: #{tpu_custom_call.1} parent=1 // pred_check_branch
      %95 = sbr.rel (0) target = $region21
    $region20: #{tpu_custom_call.1} parent=1 // pred_region
      %97 = vsyncadd [#allocation4], 0
      %s99 = sshll.u32 [#allocation5], 4
      %s100 = int_to_ptr.vmem [resolvable:$true] %s99
      %s101 = sshll.u32 %s3, 4
      %s102 = int_to_ptr.hbm [resolvable:$true] %s101
      %104 = dma.vmem_to_hbm [thread:$0]  %s100, 128, %s102, [#allocation4]
    $region21: #{tpu_custom_call.1} parent=1 // pred_fallthru
      _
    // Predicated region
    $region22: #{tpu_custom_call.1} parent=1 // pred_check
      _
    $region23: #{tpu_custom_call.1} parent=1 // pred_check_branch
      %106 = sbr.rel (0) target = $region25
    $region24: #{tpu_custom_call.1} parent=1 // pred_region
      %108 = dma.done [#allocation4], 128
    $region25: #{tpu_custom_call.1} parent=1 // pred_fallthru
      _
    %109 = vsyncpa [#allocation3], 1
    %110 = vsyncpa [#allocation4], 1

</llo_original>
